<compile_context>
chip_gen: v7x
topology: tpu7x:2x2x1
jax: 0.10.0
libtpu: 0.0.40
codegen_flags: <defaults>
</compile_context>

<pallas_src>
import functools
import math

import jax
import jax.numpy as jnp
from jax.experimental import pallas as pl
from jax.experimental.pallas import tpu as pltpu

_BN_EPS = 1e-5
EXPANSION = 4  # Bottleneck expansion

_LANE = 128
_SUBLANE_BF16 = 16   # bf16 packs 16 rows per sublane group
_TM_MAX = 1024
_TN_MAX = 256
_TK_MAX = 1024


def _round_up(x, m):
    return ((x + m - 1) // m) * m


def _pick_tile(padded_dim, maximum, step):
    """Largest multiple of `step` <= maximum that divides `padded_dim`."""
    t = (min(maximum, padded_dim) // step) * step
    t = max(t, step)
    while padded_dim % t:
        t -= step
    return t


def _pick_tile_pref(padded_dim, maximum, pref_step=256, fallback_step=_LANE):
    # Prefer 256-aligned tiles (v6e/v7x MXU is 2x256x256); fall back to 128.
    if padded_dim % pref_step == 0:
        return _pick_tile(padded_dim, maximum, pref_step)
    return _pick_tile(padded_dim, maximum, fallback_step)


# ----------------------------------------------------------------------------
# Pallas kernels
# ----------------------------------------------------------------------------
def _matmul_stats_kernel(x_ref, w_ref, o_ref, s_ref, ss_ref, acc_ref):
    """Tiled bf16 matmul + fused per-channel sum / sum-of-squares epilogue."""
    @pl.when(pl.program_id(2) == 0)
    def _init():
        acc_ref[...] = jnp.zeros_like(acc_ref)

    acc_ref[...] += jnp.dot(x_ref[...], w_ref[...],
                            preferred_element_type=jnp.float32)

    @pl.when(pl.program_id(2) == pl.num_programs(2) - 1)
    def _store():
        y = acc_ref[...]
        o_ref[...] = y
        # Column stats from the f32 accumulator already in VMEM (free-ish:
        # XLU reduce, not the binding MXU slot).  Padded rows are exact zeros.
        s_ref[0] = jnp.sum(y, axis=0, keepdims=True)
        ss_ref[0] = jnp.sum(y * y, axis=0, keepdims=True)


def _bn_apply_kernel(y_ref, sc_ref, bi_ref, o_ref, *, relu):
    y = y_ref[...] * sc_ref[...] + bi_ref[...]
    if relu:
        y = jnp.maximum(y, 0.0)
    o_ref[...] = y.astype(o_ref.dtype)           # bf16 activation out


def _bn_apply_res_kernel(y_ref, sc_ref, bi_ref, r_ref, o_ref, *, relu):
    y = y_ref[...] * sc_ref[...] + bi_ref[...] + r_ref[...].astype(jnp.float32)
    if relu:
        y = jnp.maximum(y, 0.0)
    o_ref[...] = y.astype(o_ref.dtype)           # bf16 activation out


# ----------------------------------------------------------------------------
# Pallas-call wrappers
# ----------------------------------------------------------------------------
def _matmul_stats(x_bf16, w_bf16, tm, tn, tk):
    mp, kp = x_bf16.shape
    _, cp = w_bf16.shape
    gm, gn, gk = mp // tm, cp // tn, kp // tk
    cost = pl.CostEstimate(
        flops=2 * mp * kp * cp,
        transcendentals=0,
        bytes_accessed=mp * kp * 2 + kp * cp * 2 + mp * cp * 4)
    return pl.pallas_call(
        _matmul_stats_kernel,
        out_shape=(jax.ShapeDtypeStruct((mp, cp), jnp.float32),
                   jax.ShapeDtypeStruct((gm, 1, cp), jnp.float32),
                   jax.ShapeDtypeStruct((gm, 1, cp), jnp.float32)),
        grid=(gm, gn, gk),
        in_specs=[pl.BlockSpec((tm, tk), lambda i, j, k: (i, k)),
                  pl.BlockSpec((tk, tn), lambda i, j, k: (k, j))],
        out_specs=(pl.BlockSpec((tm, tn), lambda i, j, k: (i, j)),
                   pl.BlockSpec((1, 1, tn), lambda i, j, k: (i, 0, j)),
                   pl.BlockSpec((1, 1, tn), lambda i, j, k: (i, 0, j))),
        scratch_shapes=[pltpu.VMEM((tm, tn), jnp.float32)],
        compiler_params=pltpu.CompilerParams(
            dimension_semantics=("parallel", "parallel", "arbitrary")),
        cost_estimate=cost,
    )(x_bf16, w_bf16)


def _bn_apply(y, scale, bias, residual, relu):
    """HBM-bound pass: y*scale + bias (+res) (+ReLU), bf16 output."""
    mp, cp = y.shape
    # Independent, larger tiles for this mem-bound pass (review item).
    tn = _pick_tile_pref(cp, 1024)
    tm_cap = max(_SUBLANE_BF16, (2 * 1024 * 1024) // (tn * 4))
    tm = _pick_tile(mp, min(2048, tm_cap), _SUBLANE_BF16)

    in_specs = [pl.BlockSpec((tm, tn), lambda i, j: (i, j)),
                pl.BlockSpec((1, tn), lambda i, j: (0, j)),
                pl.BlockSpec((1, tn), lambda i, j: (0, j))]
    args = [y, scale, bias]
    if residual is not None:
        in_specs.append(pl.BlockSpec((tm, tn), lambda i, j: (i, j)))
        args.append(residual)
        kernel = functools.partial(_bn_apply_res_kernel, relu=relu)
    else:
        kernel = functools.partial(_bn_apply_kernel, relu=relu)
    return pl.pallas_call(
        kernel,
        out_shape=jax.ShapeDtypeStruct((mp, cp), jnp.bfloat16),
        grid=(mp // tm, cp // tn),
        in_specs=in_specs,
        out_specs=pl.BlockSpec((tm, tn), lambda i, j: (i, j)),
        compiler_params=pltpu.CompilerParams(
            dimension_semantics=("parallel", "parallel")),
    )(*args)


# ----------------------------------------------------------------------------
# JAX glue: im2col, fused conv+BN(+res)+ReLU, maxpool
# ----------------------------------------------------------------------------
def _im2col(x, k, stride, dilation, padding):
    # x: (N, H, W, C) -> ((N*Ho*Wo, k*k*C), Ho, Wo); C is already lane-padded.
    N, H, W, C = x.shape
    eff = dilation * (k - 1) + 1
    Ho = (H + 2 * padding - eff) // stride + 1
    Wo = (W + 2 * padding - eff) // stride + 1
    xp = jnp.pad(x, ((0, 0), (padding, padding), (padding, padding), (0, 0)))
    cols = []
    for ki in range(k):
        for kj in range(k):
            hs = ki * dilation
            ws = kj * dilation
            cols.append(xp[:, hs: hs + (Ho - 1) * stride + 1: stride,
                              ws: ws + (Wo - 1) * stride + 1: stride, :])
    mat = jnp.concatenate(cols, axis=-1) if len(cols) > 1 else cols[0]
    return mat.reshape(N * Ho * Wo, k * k * C), Ho, Wo


def conv_bn(x, p, *, stride=1, dilation=1, padding=0, relu=True, residual=None):
    """conv (no bias) + train-mode BatchNorm + optional residual add + ReLU.

    Input/output activations are bf16, NHWC with lane-padded channels.
    """
    N = x.shape[0]
    k = p['ksize']
    x_mat, Ho, Wo = _im2col(x, k, stride, dilation, padding)
    M, K = x_mat.shape
    assert K == p['kdim'], (K, p['kdim'])
    Kp, Cp = p['w'].shape
    Mp = _round_up(M, _SUBLANE_BF16)

    tm = _pick_tile(Mp, _TM_MAX, _SUBLANE_BF16)
    tn = _pick_tile_pref(Cp, _TN_MAX)
    tk = _pick_tile_pref(Kp, _TK_MAX)
    # v7x megacore: keep at least one "parallel" grid axis with extent > 1.
    if Mp // tm == 1 and Cp // tn == 1 and Mp >= 2 * _SUBLANE_BF16:
        tm = _pick_tile(Mp, Mp // 2, _SUBLANE_BF16)

    if (Mp, Kp) != (M, K):
        x_mat = jnp.pad(x_mat, ((0, Mp - M), (0, Kp - K)))

    # One Pallas call: matmul + fused per-channel sum / sum-of-squares.
    y, psum, psumsq = _matmul_stats(x_mat, p['w'], tm, tn, tk)

    # Batch statistics over the true M rows (padded rows are exact zeros so
    # they add nothing to either sum).  var = E[y^2]-mean^2 in f32, clamped.
    inv_m = 1.0 / float(M)
    mean = jnp.sum(psum[:, 0, :], axis=0, keepdims=True) * inv_m        # (1,Cp)
    ex2 = jnp.sum(psumsq[:, 0, :], axis=0, keepdims=True) * inv_m
    var = jnp.maximum(ex2 - mean * mean, 0.0)
    inv = jax.lax.rsqrt(var + _BN_EPS)
    # Padded channels: gamma == 0 exactly -> scale = 0, bias = 0, so padded
    # channels stay zero and can safely flow to the next layer.
    scale = p['gamma'] * inv
    bias = p['beta'] - mean * scale

    res = None
    if residual is not None:
        res = residual.reshape(M, Cp)           # channels already padded
        if Mp != M:
            res = jnp.pad(res, ((0, Mp - M), (0, 0)))

    out = _bn_apply(y, scale, bias, res, relu)  # (Mp, Cp) bf16
    if Mp != M:
        out = out[:M]
    return out.reshape(N, Ho, Wo, Cp)


def maxpool2d(x, k=3, stride=2, padding=1):
    # Fused XLA maximum tree over the k*k shifted strided views; operates on
    # bf16, padded channels stay zero (every window contains a valid pixel).
    N, H, W, C = x.shape
    Ho = (H + 2 * padding - k) // stride + 1
    Wo = (W + 2 * padding - k) // stride + 1
    neg = jnp.finfo(x.dtype).min
    xp = jnp.pad(x, ((0, 0), (padding, padding), (padding, padding), (0, 0)),
                 constant_values=neg)
    out = None
    for ki in range(k):
        for kj in range(k):
            patch = xp[:, ki: ki + (Ho - 1) * stride + 1: stride,
                          kj: kj + (Wo - 1) * stride + 1: stride, :]
            out = patch if out is None else jnp.maximum(out, patch)
    return out


# ----------------------------------------------------------------------------
# Parameter construction (mirrors ResNet.__init__ / _init_weight)
# ----------------------------------------------------------------------------
def _make_conv_bn(key, cout, cin, k, pad_in=True):
    # Conv weight: normal(0, sqrt(2/n)), n = k*k*cout (ResNet._init_weight).
    n = k * k * cout
    w = jax.random.normal(key, (cout, cin, k, k), jnp.float32) * math.sqrt(2.0 / n)
    # Incoming activations carry lane-padded channels; pad the cin axis of the
    # weight with zeros so the im2col K layout matches (hoisted to init time).
    cin_eff = _round_up(cin, _LANE) if pad_in else cin
    w_mat = jnp.transpose(w, (2, 3, 1, 0))                  # (k, k, cin, cout)
    if cin_eff != cin:
        w_mat = jnp.pad(w_mat, ((0, 0), (0, 0), (0, cin_eff - cin), (0, 0)))
    K = k * k * cin_eff
    Kp = _round_up(K, _LANE)
    Cp = _round_up(cout, _LANE)
    w_mat = w_mat.reshape(K, cout)
    w_mat = jnp.pad(w_mat, ((0, Kp - K), (0, Cp - cout))).astype(jnp.bfloat16)
    gamma = jnp.pad(jnp.ones((1, cout), jnp.float32), ((0, 0), (0, Cp - cout)))
    beta = jnp.zeros((1, Cp), jnp.float32)
    return {'w': w_mat, 'gamma': gamma, 'beta': beta,
            'ksize': k, 'cin': cin, 'cout': cout, 'kdim': K}


def init_resnet_params(key, layers=(1, 1, 1), output_stride=16):
    if output_stride == 16:
        strides, dilations = [1, 2, 2, 1], [1, 1, 1, 2]
    elif output_stride == 8:
        strides, dilations = [1, 2, 1, 1], [1, 1, 2, 4]
    else:
        raise NotImplementedError
    mg_blocks = [1, 2, 4]

    keys = iter(jax.random.split(key, 256))
    params = {'stem': _make_conv_bn(next(keys), 64, 3, 7, pad_in=False)}
    inplanes = 64

    def make_block(inpl, planes, stride, dilation, with_ds):
        blk = {
            'cb1': _make_conv_bn(next(keys), planes, inpl, 1),
            'cb2': _make_conv_bn(next(keys), planes, planes, 3),
            'cb3': _make_conv_bn(next(keys), planes * EXPANSION, planes, 1),
            'stride': stride,
            'dilation': dilation,
        }
        if with_ds:
            blk['ds'] = _make_conv_bn(next(keys), planes * EXPANSION, inpl, 1)
        return blk

    def make_layer(planes, nblocks, stride, dilation):
        nonlocal inplanes
        with_ds = (stride != 1) or (inplanes != planes * EXPANSION)
        blocks_list = [make_block(inplanes, planes, stride, dilation, with_ds)]
        inplanes = planes * EXPANSION
        for _ in range(1, nblocks):
            blocks_list.append(make_block(inplanes, planes, 1, dilation, False))
        return blocks_list

    def make_mg_unit(planes, blocks, stride, dilation):
        nonlocal inplanes
        with_ds = (stride != 1) or (inplanes != planes * EXPANSION)
        blocks_list = [make_block(inplanes, planes, stride,
                                  blocks[0] * dilation, with_ds)]
        inplanes = planes * EXPANSION
        for i in range(1, len(blocks)):
            blocks_list.append(make_block(inplanes, planes, 1,
                                          blocks[i] * dilation, False))
        return blocks_list

    params['layer1'] = make_layer(64, layers[0], strides[0], dilations[0])
    params['layer2'] = make_layer(128, layers[1], strides[1], dilations[1])
    params['layer3'] = make_layer(256, layers[2], strides[2], dilations[2])
    params['layer4'] = make_mg_unit(512, mg_blocks, strides[3], dilations[3])
    return params


# ----------------------------------------------------------------------------
# Forward pass (mirrors ResNet.forward / Bottleneck.forward)
# ----------------------------------------------------------------------------
def bottleneck_forward(x, blk):
    stride, dilation = blk['stride'], blk['dilation']
    if 'ds' in blk:
        identity = conv_bn(x, blk['ds'], stride=stride, relu=False)
    else:
        identity = x
    out = conv_bn(x, blk['cb1'], relu=True)
    out = conv_bn(out, blk['cb2'], stride=stride, dilation=dilation,
                  padding=dilation, relu=True)
    out = conv_bn(out, blk['cb3'], relu=True, residual=identity)
    return out


def resnet_forward(params, x_nchw):
    # NCHW (PyTorch) -> NHWC internally; activations flow in bf16 with
    # lane-padded channels, sliced back to true channels only at the outputs.
    x = jnp.transpose(x_nchw, (0, 2, 3, 1)).astype(jnp.bfloat16)
    x = conv_bn(x, params['stem'], stride=2, padding=3, relu=True)
    x = maxpool2d(x, k=3, stride=2, padding=1)
    for blk in params['layer1']:
        x = bottleneck_forward(x, blk)
    low_level_feat = x
    for blk in params['layer2']:
        x = bottleneck_forward(x, blk)
    for blk in params['layer3']:
        x = bottleneck_forward(x, blk)
    for blk in params['layer4']:
        x = bottleneck_forward(x, blk)

    c_high = params['layer4'][-1]['cb3']['cout']   # 2048
    c_low = params['layer1'][-1]['cb3']['cout']    # 256
    x = jnp.transpose(x[..., :c_high], (0, 3, 1, 2)).astype(jnp.float32)
    low_level_feat = jnp.transpose(low_level_feat[..., :c_low],
                                   (0, 3, 1, 2)).astype(jnp.float32)
    return x, low_level_feat


if __name__ == "__main__":
    key = jax.random.PRNGKey(0)
    pkey, xkey = jax.random.split(key)
    # Small synthetic config: Bottleneck, layers=(1,1,1), output_stride=16.
    params = init_resnet_params(pkey, layers=(1, 1, 1), output_stride=16)
    x = jax.random.normal(xkey, (2, 3, 32, 32), jnp.float32)  # NCHW input

    out, low = resnet_forward(params, x)
    out = jax.block_until_ready(out)
    low = jax.block_until_ready(low)

    assert out.shape == (2, 2048, 2, 2), out.shape       # stride-16 feature map
    assert low.shape == (2, 256, 8, 8), low.shape        # low-level (layer1) feat
    assert bool(jnp.all(jnp.isfinite(out))) and bool(jnp.all(jnp.isfinite(low)))
    print("KERNEL_OK")
</pallas_src>

<mosaic_0001>
module attributes {stable_mosaic.version = 11 : i64} {
  func.func @_matmul_stats_kernel(%arg0: i32, %arg1: i32, %arg2: i32, %arg3: memref<256x256xbf16, #tpu.memory_space<vmem>>, %arg4: memref<256x128xbf16, #tpu.memory_space<vmem>>, %arg5: memref<256x128xf32, #tpu.memory_space<vmem>>, %arg6: memref<1x1x128xf32, #tpu.memory_space<vmem>>, %arg7: memref<1x1x128xf32, #tpu.memory_space<vmem>>, %arg8: memref<256x128xf32, #tpu.memory_space<vmem>>) attributes {dimension_semantics = [#tpu.dimension_semantics<parallel>, #tpu.dimension_semantics<parallel>, #tpu.dimension_semantics<arbitrary>], iteration_bounds = array<i64: 2, 1, 1>, scalar_prefetch = 0 : i64, scratch_operands = 1 : i64, tpu.core_type = #tpu.core_type<tc>, window_params = [{transform_indices = @transform_0, window_bounds = array<i64: 256, 256>}, {transform_indices = @transform_1, window_bounds = array<i64: 256, 128>}, {transform_indices = @transform_2, window_bounds = array<i64: 256, 128>}, {transform_indices = @transform_3, window_bounds = array<i64: 1, 1, 128>}, {transform_indices = @transform_4, window_bounds = array<i64: 1, 1, 128>}]} {
    %c0_i32 = arith.constant 0 : i32
    %0 = arith.cmpi eq, %arg2, %c0_i32 : i32
    %1 = arith.extui %0 : i1 to i32
    %c0_i32_0 = arith.constant 0 : i32
    %2 = arith.cmpi ne, %1, %c0_i32_0 : i32
    scf.if %2 {
      %cst_10 = arith.constant 0.000000e+00 : f32
      %12 = vector.broadcast %cst_10 : f32 to vector<256x128xf32>
      %c0_11 = arith.constant 0 : index
      %c0_12 = arith.constant 0 : index
      %13 = vector.load %arg8[%c0_11, %c0_12] : memref<256x128xf32, #tpu.memory_space<vmem>>, vector<256x128xf32>
      tpu.vector_store %arg8[%c0_11, %c0_12], %12 {strides = array<i32>} : memref<256x128xf32, #tpu.memory_space<vmem>>, vector<256x128xf32>,
    } else {
    }
    %c0 = arith.constant 0 : index
    %c0_1 = arith.constant 0 : index
    %3 = vector.load %arg8[%c0, %c0_1] : memref<256x128xf32, #tpu.memory_space<vmem>>, vector<256x128xf32>
    %c0_2 = arith.constant 0 : index
    %c0_3 = arith.constant 0 : index
    %4 = vector.load %arg3[%c0_2, %c0_3] : memref<256x256xbf16, #tpu.memory_space<vmem>>, vector<256x256xbf16>
    %c0_4 = arith.constant 0 : index
    %c0_5 = arith.constant 0 : index
    %5 = vector.load %arg4[%c0_4, %c0_5] : memref<256x128xbf16, #tpu.memory_space<vmem>>, vector<256x128xbf16>
    %cst = arith.constant dense<0.000000e+00> : vector<256x128xf32>
    %6 = tpu.matmul %4, %5, %cst {dimension_numbers = #tpu.dot_dimension_numbers<[1], [0], [0], [1], [0, 0, 1, 1], [], []>} : vector<256x256xbf16>, vector<256x128xbf16>, vector<256x128xf32> -> vector<256x128xf32>
    %7 = arith.addf %3, %6 : vector<256x128xf32>
    %c0_6 = arith.constant 0 : index
    %c0_7 = arith.constant 0 : index
    %8 = vector.load %arg8[%c0_6, %c0_7] : memref<256x128xf32, #tpu.memory_space<vmem>>, vector<256x128xf32>
    tpu.vector_store %arg8[%c0_6, %c0_7], %7 {strides = array<i32>} : memref<256x128xf32, #tpu.memory_space<vmem>>, vector<256x128xf32>,
    %c0_i32_8 = arith.constant 0 : i32
    %9 = arith.cmpi eq, %arg2, %c0_i32_8 : i32
    %10 = arith.extui %9 : i1 to i32
    %c0_i32_9 = arith.constant 0 : i32
    %11 = arith.cmpi ne, %10, %c0_i32_9 : i32
    scf.if %11 {
      %c0_10 = arith.constant 0 : index
      %c0_11 = arith.constant 0 : index
      %12 = vector.load %arg8[%c0_10, %c0_11] : memref<256x128xf32, #tpu.memory_space<vmem>>, vector<256x128xf32>
      %c0_12 = arith.constant 0 : index
      %c0_13 = arith.constant 0 : index
      %13 = vector.load %arg5[%c0_12, %c0_13] : memref<256x128xf32, #tpu.memory_space<vmem>>, vector<256x128xf32>
      tpu.vector_store %arg5[%c0_12, %c0_13], %12 {strides = array<i32>} : memref<256x128xf32, #tpu.memory_space<vmem>>, vector<256x128xf32>,
      %cst_14 = arith.constant dense<0.000000e+00> : vector<128xf32>
      %14 = vector.multi_reduction <add>, %12, %cst_14 [0] : vector<256x128xf32> to vector<128xf32>
      %15 = vector.shape_cast %14 : vector<128xf32> to vector<1x128xf32>
      %c0_15 = arith.constant 0 : index
      %c0_16 = arith.constant 0 : index
      %c0_17 = arith.constant 0 : index
      %16 = vector.load %arg6[%c0_15, %c0_16, %c0_17] : memref<1x1x128xf32, #tpu.memory_space<vmem>>, vector<1x1x128xf32>
      %17 = vector.shape_cast %16 : vector<1x1x128xf32> to vector<1x128xf32>
      %18 = vector.shape_cast %15 : vector<1x128xf32> to vector<1x1x128xf32>
      tpu.vector_store %arg6[%c0_15, %c0_16, %c0_17], %18 {strides = array<i32>} : memref<1x1x128xf32, #tpu.memory_space<vmem>>, vector<1x1x128xf32>,
      %19 = arith.mulf %12, %12 : vector<256x128xf32>
      %cst_18 = arith.constant dense<0.000000e+00> : vector<128xf32>
      %20 = vector.multi_reduction <add>, %19, %cst_18 [0] : vector<256x128xf32> to vector<128xf32>
      %21 = vector.shape_cast %20 : vector<128xf32> to vector<1x128xf32>
      %c0_19 = arith.constant 0 : index
      %c0_20 = arith.constant 0 : index
      %c0_21 = arith.constant 0 : index
      %22 = vector.load %arg7[%c0_19, %c0_20, %c0_21] : memref<1x1x128xf32, #tpu.memory_space<vmem>>, vector<1x1x128xf32>
      %23 = vector.shape_cast %22 : vector<1x1x128xf32> to vector<1x128xf32>
      %24 = vector.shape_cast %21 : vector<1x128xf32> to vector<1x1x128xf32>
      tpu.vector_store %arg7[%c0_19, %c0_20, %c0_21], %24 {strides = array<i32>} : memref<1x1x128xf32, #tpu.memory_space<vmem>>, vector<1x1x128xf32>,
    } else {
    }
    return
  }
  func.func @transform_0(%arg0: i32, %arg1: i32, %arg2: i32) -> (i32, i32) {
    %c0_i32 = arith.constant 0 : i32
    return %arg0, %arg2 : i32, i32
  }
  func.func @transform_1(%arg0: i32, %arg1: i32, %arg2: i32) -> (i32, i32) {
    %c0_i32 = arith.constant 0 : i32
    return %arg2, %arg1 : i32, i32
  }
  func.func @transform_2(%arg0: i32, %arg1: i32, %arg2: i32) -> (i32, i32) {
    %c0_i32 = arith.constant 0 : i32
    return %arg0, %arg1 : i32, i32
  }
  func.func @transform_3(%arg0: i32, %arg1: i32, %arg2: i32) -> (i32, i32, i32) {
    %c0_i32 = arith.constant 0 : i32
    %c0_i32_0 = arith.constant 0 : i32
    return %arg0, %c0_i32, %arg1 : i32, i32, i32
  }
  func.func @transform_4(%arg0: i32, %arg1: i32, %arg2: i32) -> (i32, i32, i32) {
    %c0_i32 = arith.constant 0 : i32
    %c0_i32_0 = arith.constant 0 : i32
    return %arg0, %c0_i32, %arg1 : i32, i32, i32
  }
}

</mosaic_0001>

<llo_original>
// kernel: tpu_custom_call.1
$region0: #{tpu_custom_call.1}
  #allocation0 [shape = 'u32[]', space=smem, size = 0x4, offset = 0x4, fixed_abs, tag = 'smem constant byte address 0x4 - core index']
  #allocation1 [shape = 'u32[144,128]{1,0:T(1,128)}', space=vmem, size = 0x12000, scoped, tag = 'internal scratch']
  #allocation2 [shape = 'f32[256,128]{1,0:T(8,128)}', space=vmem, size = 0x20000, scoped, tag = 'scratch operand']
  %s0 = inlined_call_operand.hbm [shape: bf16[512,256], index: 0, kind: input, shape index: {}]
  %s1 = inlined_call_operand.hbm [shape: bf16[256,128], index: 1, kind: input, shape index: {}]
  %s2 = inlined_call_operand.hbm [shape: f32[512,128], index: 2, kind: output, shape index: {0}]
  %s3 = inlined_call_operand.hbm [shape: f32[2,1,128], index: 3, kind: output, shape index: {1}]
  %s4 = inlined_call_operand.hbm [shape: f32[2,1,128], index: 4, kind: output, shape index: {2}]
  %5 = xla_tuple %s2, %s3, %s4
  %s6 = sld [smem:[#allocation0]]
  $region73: #{tpu_custom_call.1} parent=0
    _
  %s8 = ssub.s32 1, %s6
  %s9 = scalar_select 0, %s8, %s6
  $region1: #{tpu_custom_call.1} parent=0
    #allocation3 [shape = 'u8[262144]{0}', space=vmem, size = 0x40000, scoped, tag = 'input window, operand 0']
    #allocation4 [shape = 's32[2]{0}', space=sflag, size = 0x8, scoped, tag = 'scoped memory for tpu_custom_call.1']
    #allocation5 [shape = 's32[2]{0}', space=sflag, size = 0x8, scoped, tag = 'scoped memory for tpu_custom_call.1']
    #allocation6 [shape = 'u8[65536]{0}', space=vmem, size = 0x10000, scoped, tag = 'input window, operand 1, single buffered']
    #allocation7 [shape = 's32[1]{0}', space=sflag, size = 0x4, scoped, tag = 'scoped memory for tpu_custom_call.1']
    #allocation8 [shape = 'u8[262144]{0}', space=vmem, size = 0x40000, scoped, tag = 'output window, operand 0']
    #allocation9 [shape = 'u8[1024]{0}', space=vmem, size = 0x400, scoped, tag = 'output window, operand 1']
    #allocation10 [shape = 's32[2]{0}', space=sflag, size = 0x8, scoped, tag = 'scoped memory for tpu_custom_call.1']
    #allocation11 [shape = 'u8[1024]{0}', space=vmem, size = 0x400, scoped, tag = 'output window, operand 2']
    %10 = vsyncpa [#allocation4], 0
    %s11 = scalar_lea.sflag [#allocation4], 1
    %12 = vsyncpa %s11, 0
    %13 = vsyncpa [#allocation7], 0
    %14 = vsyncpa [#allocation5], 0
    %s15 = scalar_lea.sflag [#allocation5], 1
    %16 = vsyncpa %s15, 0
    %17 = vsyncpa [#allocation10], 0
    %s18 = scalar_lea.sflag [#allocation10], 1
    %19 = vsyncpa %s18, 0
    loop: start=0, step=1, limit=4
    $region2: #{tpu_custom_call.1} parent=1 // loop_pre_header
      _
    $region3: #{tpu_custom_call.1} parent=1 // loop_header
      %s21 = sphi 0, %s25
      %p22 = scmp.ge.s32.totalorder %s21, 4
      %s28 = sphi 0, %s47
      %s29 = sphi 0, %s43
      %s30 = sphi 0, %s39
      %s31 = sphi 0, %s28
      %s32 = sphi 0, %s29
      %s33 = sphi 0, %s30
      %s34 = sphi 0, %s31
      %s35 = sphi 0, %s32
      %s36 = sphi 0, %s33
      %s52 = sphi 0, %s54
      %s55 = sphi 0, %s52
      %s56 = sphi 0, %s55
      %s72 = sphi 0, %s56
      %s80 = sphi 0, %s82
      %s83 = sphi 0, %s80
      %s84 = sphi 0, %s83
      %s100 = sphi 0, %s84
      %s108 = sphi 0, %s110
      %s111 = sphi 0, %s108
      %s112 = sphi 0, %s111
      %s128 = sphi 0, %s112
      %s136 = sphi 0, %s138
      %s139 = sphi 0, %s136
      %s140 = sphi 0, %s139
      %s156 = sphi 0, %s140
      %s164 = sphi 0, %s166
      %s167 = sphi 0, %s164
      %s168 = sphi 0, %s167
      %s184 = sphi 0, %s168
    $region4: #{tpu_custom_call.1} parent=1 // loop_header_branch
      %24 = sbr.rel (%p22) target = $region8
    $region5: #{tpu_custom_call.1} parent=1 // loop_body
      %s26 = ssub.s32 %s21, 1
      %s27 = ssub.s32 %s21, 2
      %s37 = sadd.s32 1, %s30
      %p38 = scmp.ge.s32.totalorder %s37, 1
      %s39 = scalar_select %p38, 0, %s37
      %s40 = sadd.s32 1, %s29
      %s41 = scalar_select %p38, %s40, %s29
      %p42 = scmp.ge.s32.totalorder %s41, 1
      %s43 = scalar_select %p42, 0, %s41
      %s44 = sadd.s32 1, %s28
      %s45 = scalar_select %p42, %s44, %s28
      %p46 = scmp.ge.s32.totalorder %s45, 2
      %s47 = scalar_select %p46, 0, %s45
      %s48 = ssub.s32 %s28, %s47
      %s49 = ssub.s32 %s30, %s39
      %s50 = sor.u32 %s48, %s49
      %p51 = scmp.eq.s32.totalorder %s50, 0
      %s53 = sadd.s32 %s52, 1
      %s54 = scalar_select %p51, %s52, %s53
      %p57 = pneg %p51
      %p58 = scmp.eq.s32.totalorder %s21, 1
      %p59 = por %p57, %p58
      %p60 = scmp.ne.s32.totalorder %s52, %s55
      %p61 = scmp.eq.s32.totalorder %s21, 0
      %p62 = por %p60, %p61
      %p63 = scmp.ne.s32.totalorder %s52, %s55
      %p64 = scmp.eq.s32.totalorder %s26, 1
      %p65 = por %p63, %p64
      %p66 = scmp.ne.s32.totalorder %s55, %s56
      %p67 = scmp.eq.s32.totalorder %s26, 0
      %p68 = por %p66, %p67
      %p69 = scmp.ne.s32.totalorder %s55, %s56
      %p70 = scmp.eq.s32.totalorder %s27, 1
      %p71 = por %p69, %p70
      %p73 = scmp.ne.s32.totalorder %s56, %s72
      %p74 = scmp.eq.s32.totalorder %s27, 0
      %p75 = por %p73, %p74
      %s76 = ssub.s32 %s30, %s39
      %s77 = ssub.s32 %s29, %s43
      %s78 = sor.u32 %s76, %s77
      %p79 = scmp.eq.s32.totalorder %s78, 0
      %s81 = sadd.s32 %s80, 1
      %s82 = scalar_select %p79, %s80, %s81
      %p85 = pneg %p79
      %p86 = scmp.eq.s32.totalorder %s21, 1
      %p87 = por %p85, %p86
      %p88 = scmp.ne.s32.totalorder %s80, %s83
      %p89 = scmp.eq.s32.totalorder %s21, 0
      %p90 = por %p88, %p89
      %p91 = scmp.ne.s32.totalorder %s80, %s83
      %p92 = scmp.eq.s32.totalorder %s26, 1
      %p93 = por %p91, %p92
      %p94 = scmp.ne.s32.totalorder %s83, %s84
      %p95 = scmp.eq.s32.totalorder %s26, 0
      %p96 = por %p94, %p95
      %p97 = scmp.ne.s32.totalorder %s83, %s84
      %p98 = scmp.eq.s32.totalorder %s27, 1
      %p99 = por %p97, %p98
      %p101 = scmp.ne.s32.totalorder %s84, %s100
      %p102 = scmp.eq.s32.totalorder %s27, 0
      %p103 = por %p101, %p102
      %s104 = ssub.s32 %s28, %s47
      %s105 = ssub.s32 %s29, %s43
      %s106 = sor.u32 %s104, %s105
      %p107 = scmp.eq.s32.totalorder %s106, 0
      %s109 = sadd.s32 %s108, 1
      %s110 = scalar_select %p107, %s108, %s109
      %p113 = pneg %p107
      %p114 = scmp.eq.s32.totalorder %s21, 1
      %p115 = por %p113, %p114
      %p116 = scmp.ne.s32.totalorder %s108, %s111
      %p117 = scmp.eq.s32.totalorder %s21, 0
      %p118 = por %p116, %p117
      %p119 = scmp.ne.s32.totalorder %s108, %s111
      %p120 = scmp.eq.s32.totalorder %s26, 1
      %p121 = por %p119, %p120
      %p122 = scmp.ne.s32.totalorder %s111, %s112
      %p123 = scmp.eq.s32.totalorder %s26, 0
      %p124 = por %p122, %p123
      %p125 = scmp.ne.s32.totalorder %s111, %s112
      %p126 = scmp.eq.s32.totalorder %s27, 1
      %p127 = por %p125, %p126
      %p129 = scmp.ne.s32.totalorder %s112, %s128
      %p130 = scmp.eq.s32.totalorder %s27, 0
      %p131 = por %p129, %p130
      %s132 = ssub.s32 %s28, %s47
      %s133 = ssub.s32 %s29, %s43
      %s134 = sor.u32 %s132, %s133
      %p135 = scmp.eq.s32.totalorder %s134, 0
      %s137 = sadd.s32 %s136, 1
      %s138 = scalar_select %p135, %s136, %s137
      %p141 = pneg %p135
      %p142 = scmp.eq.s32.totalorder %s21, 1
      %p143 = por %p141, %p142
      %p144 = scmp.ne.s32.totalorder %s136, %s139
      %p145 = scmp.eq.s32.totalorder %s21, 0
      %p146 = por %p144, %p145
      %p147 = scmp.ne.s32.totalorder %s136, %s139
      %p148 = scmp.eq.s32.totalorder %s26, 1
      %p149 = por %p147, %p148
      %p150 = scmp.ne.s32.totalorder %s139, %s140
      %p151 = scmp.eq.s32.totalorder %s26, 0
      %p152 = por %p150, %p151
      %p153 = scmp.ne.s32.totalorder %s139, %s140
      %p154 = scmp.eq.s32.totalorder %s27, 1
      %p155 = por %p153, %p154
      %p157 = scmp.ne.s32.totalorder %s140, %s156
      %p158 = scmp.eq.s32.totalorder %s27, 0
      %p159 = por %p157, %p158
      %s160 = ssub.s32 %s28, %s47
      %s161 = ssub.s32 %s29, %s43
      %s162 = sor.u32 %s160, %s161
      %p163 = scmp.eq.s32.totalorder %s162, 0
      %s165 = sadd.s32 %s164, 1
      %s166 = scalar_select %p163, %s164, %s165
      %p169 = pneg %p163
      %p170 = scmp.eq.s32.totalorder %s21, 1
      %p171 = por %p169, %p170
      %p172 = scmp.ne.s32.totalorder %s164, %s167
      %p173 = scmp.eq.s32.totalorder %s21, 0
      %p174 = por %p172, %p173
      %p175 = scmp.ne.s32.totalorder %s164, %s167
      %p176 = scmp.eq.s32.totalorder %s26, 1
      %p177 = por %p175, %p176
      %p178 = scmp.ne.s32.totalorder %s167, %s168
      %p179 = scmp.eq.s32.totalorder %s26, 0
      %p180 = por %p178, %p179
      %p181 = scmp.ne.s32.totalorder %s167, %s168
      %p182 = scmp.eq.s32.totalorder %s27, 1
      %p183 = por %p181, %p182
      %p185 = scmp.ne.s32.totalorder %s168, %s184
      %p186 = scmp.eq.s32.totalorder %s27, 0
      %p187 = por %p185, %p186
      %p188 = scmp.le.s32.totalorder 1, %s21
      %p189 = scmp.lt.s32.totalorder %s21, 3
      %p190 = pnand %p188, %p189
      %p191 = pneg %p190
      // Predicated region
      $region9: #{tpu_custom_call.1} parent=5 // pred_check
        _
      $region10: #{tpu_custom_call.1} parent=5 // pred_check_branch
        %193 = sbr.rel (%p190) target = $region12
      $region11: #{tpu_custom_call.1} parent=5 // pred_region
        %s194 = ssub.s32 %s21, 1
        // Predicated region
        $region13: #{tpu_custom_call.1} parent=11 // pred_check
          %p195 = pneg %p96
        $region14: #{tpu_custom_call.1} parent=11 // pred_check_branch
          %197 = sbr.rel (%p195) target = $region16
        $region15: #{tpu_custom_call.1} parent=11 // pred_region
          %s198 = smul.u32 32, %s33
          %s200 = ssub.s32 2048, 2048
          %201 = vsyncadd [#allocation7], %s200
          %s202 = sadd.s32 %s32, %s198
          %s203 = smul.addr %s202, 64
          %s204 = scalar_lea.hbm %s1, %s203
          %s205 = sshll.u32 [#allocation6], 4
          %s206 = int_to_ptr.vmem [resolvable:$true] %s205
          %211 = dma.hbm_to_vmem [thread:$0]  %s204, 2048, %s206, [#allocation7], 64, 64, 4
        $region16: #{tpu_custom_call.1} parent=11 // pred_fallthru
          _
      $region12: #{tpu_custom_call.1} parent=5 // pred_fallthru
        _
      %p212 = scmp.lt.s32.totalorder %s21, 2
      // Predicated region
      $region17: #{tpu_custom_call.1} parent=5 // pred_check
        %p213 = pneg %p212
      $region18: #{tpu_custom_call.1} parent=5 // pred_check_branch
        %215 = sbr.rel (%p213) target = $region20
      $region19: #{tpu_custom_call.1} parent=5 // pred_region
        // Predicated region
        $region21: #{tpu_custom_call.1} parent=19 // pred_check
          %p216 = pneg %p62
        $region22: #{tpu_custom_call.1} parent=19 // pred_check_branch
          %218 = sbr.rel (%p216) target = $region24
        $region23: #{tpu_custom_call.1} parent=19 // pred_region
          %s219 = sand.u32 %s52, 1
          %s220 = scalar_lea.sflag [#allocation4], %s219
          %s221 = sand.u32 %s52, 1
          %s222 = smul.addr %s221, 256
          %s223 = scalar_lea.vmem [#allocation3], %s222
          %s224 = smul.u32 32, %s28
          %s225 = smul.u32 2, %s30
          %s227 = ssub.s32 4096, 4096
          %228 = vsyncadd %s220, %s227
          %s229 = smul.addr %s224, 2
          %s230 = sadd.s32 %s225, %s229
          %s231 = smul.addr %s230, 64
          %s232 = scalar_lea.hbm %s0, %s231
          %s233 = sshll.u32 %s223, 4
          %s234 = int_to_ptr.vmem [resolvable:$true] %s233
          %239 = dma.hbm_to_vmem [thread:$0]  %s232, 4096, %s234, %s220, 128, 128, 8
        $region24: #{tpu_custom_call.1} parent=19 // pred_fallthru
          _
      $region20: #{tpu_custom_call.1} parent=5 // pred_fallthru
        _
      %p240 = scmp.le.s32.totalorder 1, %s21
      %p241 = scmp.lt.s32.totalorder %s21, 3
      %p242 = pnand %p240, %p241
      %p243 = pneg %p242
      // Predicated region
      $region25: #{tpu_custom_call.1} parent=5 // pred_check
        _
      $region26: #{tpu_custom_call.1} parent=5 // pred_check_branch
        %245 = sbr.rel (%p242) target = $region28
      $region27: #{tpu_custom_call.1} parent=5 // pred_region
        %s246 = ssub.s32 %s21, 1
        %s247 = sand.u32 %s55, 1
        %s248 = scalar_lea.sflag [#allocation4], %s247
        %s249 = sand.u32 %s55, 1
        %s250 = smul.addr %s249, 256
        %s251 = scalar_lea.vmem [#allocation3], %s250
        // Predicated region
        $region29: #{tpu_custom_call.1} parent=27 // pred_check
          %p252 = pneg %p68
        $region30: #{tpu_custom_call.1} parent=27 // pred_check_branch
          %254 = sbr.rel (%p252) target = $region32
        $region31: #{tpu_custom_call.1} parent=27 // pred_region
          %255 = dma.done %s248, 4096
        $region32: #{tpu_custom_call.1} parent=27 // pred_fallthru
          _
        // Predicated region
        $region33: #{tpu_custom_call.1} parent=27 // pred_check
          %p256 = pneg %p96
        $region34: #{tpu_custom_call.1} parent=27 // pred_check_branch
          %258 = sbr.rel (%p256) target = $region36
        $region35: #{tpu_custom_call.1} parent=27 // pred_region
          %259 = dma.done [#allocation7], 2048
        $region36: #{tpu_custom_call.1} parent=27 // pred_fallthru
          _
        %s260 = sand.u32 %s55, 1
        %s261 = scalar_lea.sflag [#allocation4], %s260
        %s262 = sand.u32 %s55, 1
        %s263 = smul.addr %s262, 256
        %s264 = scalar_lea.vmem [#allocation3], %s263
        %p265 = pneg %p68
        %p266 = pneg %p65
        %p267 = pneg %p96
        %p268 = pneg %p93
        %p269 = pneg %p124
        %p270 = pneg %p121
        %s271 = sand.u32 %s111, 1
        %s272 = scalar_lea.sflag [#allocation5], %s271
        %s273 = sand.u32 %s111, 1
        %s274 = smul.addr %s273, 256
        %s275 = scalar_lea.vmem [#allocation8], %s274
        %p276 = pneg %p152
        %p277 = pneg %p149
        %s278 = sand.u32 %s26, 1
        %s279 = scalar_lea.sflag [#allocation10], %s278
        %s280 = sand.u32 %s139, 1
        %s281 = scalar_lea.vmem [#allocation9], %s280
        %p282 = pneg %p180
        %p283 = pneg %p177
        %s284 = sand.u32 %s26, 1
        %s285 = scalar_lea.sflag [#allocation10], %s284
        %s286 = sand.u32 %s167, 1
        %s287 = scalar_lea.vmem [#allocation11], %s286
        %s288 = smul.u32 32, %s31
        %s289 = smul.u32 2, %s33
        %s290 = smul.u32 32, %s33
        %s291 = smul.u32 32, %s31
        %p293 = scmp.eq.s32.totalorder %s33, 0
        // Predicated region
        $region37: #{tpu_custom_call.1} parent=27 // pred_check
          %p294 = pneg %p293
        $region38: #{tpu_custom_call.1} parent=27 // pred_check_branch
          %296 = sbr.rel (%p294) target = $region40
        $region39: #{tpu_custom_call.1} parent=27 // pred_region
          %297 = vst [vmem:[#allocation2] sm:$0xff] 0.0
          %298 = vst [vmem:[#allocation2 + $0x8] sm:$0xff] 0.0
          %299 = vst [vmem:[#allocation2 + $0x10] sm:$0xff] 0.0
          %300 = vst [vmem:[#allocation2 + $0x18] sm:$0xff] 0.0
          %301 = vst [vmem:[#allocation2 + $0x20] sm:$0xff] 0.0
          %302 = vst [vmem:[#allocation2 + $0x28] sm:$0xff] 0.0
          %303 = vst [vmem:[#allocation2 + $0x30] sm:$0xff] 0.0
          %304 = vst [vmem:[#allocation2 + $0x38] sm:$0xff] 0.0
          %305 = vst [vmem:[#allocation2 + $0x40] sm:$0xff] 0.0
          %306 = vst [vmem:[#allocation2 + $0x48] sm:$0xff] 0.0
          %307 = vst [vmem:[#allocation2 + $0x50] sm:$0xff] 0.0
          %308 = vst [vmem:[#allocation2 + $0x58] sm:$0xff] 0.0
          %309 = vst [vmem:[#allocation2 + $0x60] sm:$0xff] 0.0
          %310 = vst [vmem:[#allocation2 + $0x68] sm:$0xff] 0.0
          %311 = vst [vmem:[#allocation2 + $0x70] sm:$0xff] 0.0
          %312 = vst [vmem:[#allocation2 + $0x78] sm:$0xff] 0.0
          %313 = vst [vmem:[#allocation2 + $0x80] sm:$0xff] 0.0
          %314 = vst [vmem:[#allocation2 + $0x88] sm:$0xff] 0.0
          %315 = vst [vmem:[#allocation2 + $0x90] sm:$0xff] 0.0
          %316 = vst [vmem:[#allocation2 + $0x98] sm:$0xff] 0.0
          %317 = vst [vmem:[#allocation2 + $0xa0] sm:$0xff] 0.0
          %318 = vst [vmem:[#allocation2 + $0xa8] sm:$0xff] 0.0
          %319 = vst [vmem:[#allocation2 + $0xb0] sm:$0xff] 0.0
          %320 = vst [vmem:[#allocation2 + $0xb8] sm:$0xff] 0.0
          %321 = vst [vmem:[#allocation2 + $0xc0] sm:$0xff] 0.0
          %322 = vst [vmem:[#allocation2 + $0xc8] sm:$0xff] 0.0
          %323 = vst [vmem:[#allocation2 + $0xd0] sm:$0xff] 0.0
          %324 = vst [vmem:[#allocation2 + $0xd8] sm:$0xff] 0.0
          %325 = vst [vmem:[#allocation2 + $0xe0] sm:$0xff] 0.0
          %326 = vst [vmem:[#allocation2 + $0xe8] sm:$0xff] 0.0
          %327 = vst [vmem:[#allocation2 + $0xf0] sm:$0xff] 0.0
          %328 = vst [vmem:[#allocation2 + $0xf8] sm:$0xff] 0.0
        $region40: #{tpu_custom_call.1} parent=27 // pred_fallthru
          _
        %v329 = vld [vmem:[#allocation2] sm:$0xff]
        %v330 = vld [vmem:[#allocation2 + $0x8] sm:$0xff]
        %v331 = vld [vmem:[#allocation2 + $0x10] sm:$0xff]
        %v332 = vld [vmem:[#allocation2 + $0x18] sm:$0xff]
        %v333 = vld [vmem:[#allocation2 + $0x20] sm:$0xff]
        %v334 = vld [vmem:[#allocation2 + $0x28] sm:$0xff]
        %v335 = vld [vmem:[#allocation2 + $0x30] sm:$0xff]
        %v336 = vld [vmem:[#allocation2 + $0x38] sm:$0xff]
        %v337 = vld [vmem:[#allocation2 + $0x40] sm:$0xff]
        %v338 = vld [vmem:[#allocation2 + $0x48] sm:$0xff]
        %v339 = vld [vmem:[#allocation2 + $0x50] sm:$0xff]
        %v340 = vld [vmem:[#allocation2 + $0x58] sm:$0xff]
        %v341 = vld [vmem:[#allocation2 + $0x60] sm:$0xff]
        %v342 = vld [vmem:[#allocation2 + $0x68] sm:$0xff]
        %v343 = vld [vmem:[#allocation2 + $0x70] sm:$0xff]
        %v344 = vld [vmem:[#allocation2 + $0x78] sm:$0xff]
        %v345 = vld [vmem:[#allocation2 + $0x80] sm:$0xff]
        %v346 = vld [vmem:[#allocation2 + $0x88] sm:$0xff]
        %v347 = vld [vmem:[#allocation2 + $0x90] sm:$0xff]
        %v348 = vld [vmem:[#allocation2 + $0x98] sm:$0xff]
        %v349 = vld [vmem:[#allocation2 + $0xa0] sm:$0xff]
        %v350 = vld [vmem:[#allocation2 + $0xa8] sm:$0xff]
        %v351 = vld [vmem:[#allocation2 + $0xb0] sm:$0xff]
        %v352 = vld [vmem:[#allocation2 + $0xb8] sm:$0xff]
        %v353 = vld [vmem:[#allocation2 + $0xc0] sm:$0xff]
        %v354 = vld [vmem:[#allocation2 + $0xc8] sm:$0xff]
        %v355 = vld [vmem:[#allocation2 + $0xd0] sm:$0xff]
        %v356 = vld [vmem:[#allocation2 + $0xd8] sm:$0xff]
        %v357 = vld [vmem:[#allocation2 + $0xe0] sm:$0xff]
        %v358 = vld [vmem:[#allocation2 + $0xe8] sm:$0xff]
        %v359 = vld [vmem:[#allocation2 + $0xf0] sm:$0xff]
        %v360 = vld [vmem:[#allocation2 + $0xf8] sm:$0xff]
        %v361 = vld [vmem:[%s251] sm:$0xff]
        %v362 = vld [vmem:[%s251 + $0x8] sm:$0xff]
        %v363 = vld [vmem:[%s251 + $0x10] sm:$0xff]
        %v364 = vld [vmem:[%s251 + $0x18] sm:$0xff]
        %v365 = vld [vmem:[%s251 + $0x20] sm:$0xff]
        %v366 = vld [vmem:[%s251 + $0x28] sm:$0xff]
        %v367 = vld [vmem:[%s251 + $0x30] sm:$0xff]
        %v368 = vld [vmem:[%s251 + $0x38] sm:$0xff]
        %v369 = vld [vmem:[%s251 + $0x40] sm:$0xff]
        %v370 = vld [vmem:[%s251 + $0x48] sm:$0xff]
        %v371 = vld [vmem:[%s251 + $0x50] sm:$0xff]
        %v372 = vld [vmem:[%s251 + $0x58] sm:$0xff]
        %v373 = vld [vmem:[%s251 + $0x60] sm:$0xff]
        %v374 = vld [vmem:[%s251 + $0x68] sm:$0xff]
        %v375 = vld [vmem:[%s251 + $0x70] sm:$0xff]
        %v376 = vld [vmem:[%s251 + $0x78] sm:$0xff]
        %v377 = vld [vmem:[%s251 + $0x80] sm:$0xff]
        %v378 = vld [vmem:[%s251 + $0x88] sm:$0xff]
        %v379 = vld [vmem:[%s251 + $0x90] sm:$0xff]
        %v380 = vld [vmem:[%s251 + $0x98] sm:$0xff]
        %v381 = vld [vmem:[%s251 + $0xa0] sm:$0xff]
        %v382 = vld [vmem:[%s251 + $0xa8] sm:$0xff]
        %v383 = vld [vmem:[%s251 + $0xb0] sm:$0xff]
        %v384 = vld [vmem:[%s251 + $0xb8] sm:$0xff]
        %v385 = vld [vmem:[%s251 + $0xc0] sm:$0xff]
        %v386 = vld [vmem:[%s251 + $0xc8] sm:$0xff]
        %v387 = vld [vmem:[%s251 + $0xd0] sm:$0xff]
        %v388 = vld [vmem:[%s251 + $0xd8] sm:$0xff]
        %v389 = vld [vmem:[%s251 + $0xe0] sm:$0xff]
        %v390 = vld [vmem:[%s251 + $0xe8] sm:$0xff]
        %v391 = vld [vmem:[%s251 + $0xf0] sm:$0xff]
        %v392 = vld [vmem:[%s251 + $0xf8] sm:$0xff]
        %v393 = vld [vmem:[#allocation6] sm:$0xf]
        %v394 = vld [vmem:[#allocation6 + $0x4] sm:$0xf]
        %v395 = vld [vmem:[#allocation6 + $0x8] sm:$0xf]
        %v396 = vld [vmem:[#allocation6 + $0xc] sm:$0xf]
        %v397 = vld [vmem:[#allocation6 + $0x10] sm:$0xf]
        %v398 = vld [vmem:[#allocation6 + $0x14] sm:$0xf]
        %v399 = vld [vmem:[#allocation6 + $0x18] sm:$0xf]
        %v400 = vld [vmem:[#allocation6 + $0x1c] sm:$0xf]
        %v401 = vld [vmem:[#allocation6 + $0x20] sm:$0xf]
        %v402 = vld [vmem:[#allocation6 + $0x24] sm:$0xf]
        %v403 = vld [vmem:[#allocation6 + $0x28] sm:$0xf]
        %v404 = vld [vmem:[#allocation6 + $0x2c] sm:$0xf]
        %v405 = vld [vmem:[#allocation6 + $0x30] sm:$0xf]
        %v406 = vld [vmem:[#allocation6 + $0x34] sm:$0xf]
        %v407 = vld [vmem:[#allocation6 + $0x38] sm:$0xf]
        %v408 = vld [vmem:[#allocation6 + $0x3c] sm:$0xf]
        %v409 = vld [vmem:[#allocation6 + $0x40] sm:$0xf]
        %v410 = vld [vmem:[#allocation6 + $0x44] sm:$0xf]
        %v411 = vld [vmem:[#allocation6 + $0x48] sm:$0xf]
        %v412 = vld [vmem:[#allocation6 + $0x4c] sm:$0xf]
        %v413 = vld [vmem:[#allocation6 + $0x50] sm:$0xf]
        %v414 = vld [vmem:[#allocation6 + $0x54] sm:$0xf]
        %v415 = vld [vmem:[#allocation6 + $0x58] sm:$0xf]
        %v416 = vld [vmem:[#allocation6 + $0x5c] sm:$0xf]
        %v417 = vld [vmem:[#allocation6 + $0x60] sm:$0xf]
        %v418 = vld [vmem:[#allocation6 + $0x64] sm:$0xf]
        %v419 = vld [vmem:[#allocation6 + $0x68] sm:$0xf]
        %v420 = vld [vmem:[#allocation6 + $0x6c] sm:$0xf]
        %v421 = vld [vmem:[#allocation6 + $0x70] sm:$0xf]
        %v422 = vld [vmem:[#allocation6 + $0x74] sm:$0xf]
        %v423 = vld [vmem:[#allocation6 + $0x78] sm:$0xf]
        %v424 = vld [vmem:[#allocation6 + $0x7c] sm:$0xf]
        %v457 = vunpack.c.l.b16 %v361
        %v458 = vunpack.c.h.b16 %v361
        %v459 = vunpack.c.l.b16 %v362
        %v460 = vunpack.c.h.b16 %v362
        %v461 = vunpack.c.l.b16 %v363
        %v462 = vunpack.c.h.b16 %v363
        %v463 = vunpack.c.l.b16 %v364
        %v464 = vunpack.c.h.b16 %v364
        %v465 = vunpack.c.l.b16 %v365
        %v466 = vunpack.c.h.b16 %v365
        %v467 = vunpack.c.l.b16 %v366
        %v468 = vunpack.c.h.b16 %v366
        %v469 = vunpack.c.l.b16 %v367
        %v470 = vunpack.c.h.b16 %v367
        %v471 = vunpack.c.l.b16 %v368
        %v472 = vunpack.c.h.b16 %v368
        %v473 = vunpack.c.l.b16 %v369
        %v474 = vunpack.c.h.b16 %v369
        %v475 = vunpack.c.l.b16 %v370
        %v476 = vunpack.c.h.b16 %v370
        %v477 = vunpack.c.l.b16 %v371
        %v478 = vunpack.c.h.b16 %v371
        %v479 = vunpack.c.l.b16 %v372
        %v480 = vunpack.c.h.b16 %v372
        %v481 = vunpack.c.l.b16 %v373
        %v482 = vunpack.c.h.b16 %v373
        %v483 = vunpack.c.l.b16 %v374
        %v484 = vunpack.c.h.b16 %v374
        %v485 = vunpack.c.l.b16 %v375
        %v486 = vunpack.c.h.b16 %v375
        %v487 = vunpack.c.l.b16 %v376
        %v488 = vunpack.c.h.b16 %v376
        %v489 = vunpack.c.l.b16 %v377
        %v490 = vunpack.c.h.b16 %v377
        %v491 = vunpack.c.l.b16 %v378
        %v492 = vunpack.c.h.b16 %v378
        %v493 = vunpack.c.l.b16 %v379
        %v494 = vunpack.c.h.b16 %v379
        %v495 = vunpack.c.l.b16 %v380
        %v496 = vunpack.c.h.b16 %v380
        %v497 = vunpack.c.l.b16 %v381
        %v498 = vunpack.c.h.b16 %v381
        %v499 = vunpack.c.l.b16 %v382
        %v500 = vunpack.c.h.b16 %v382
        %v501 = vunpack.c.l.b16 %v383
        %v502 = vunpack.c.h.b16 %v383
        %v503 = vunpack.c.l.b16 %v384
        %v504 = vunpack.c.h.b16 %v384
        %v505 = vunpack.c.l.b16 %v385
        %v506 = vunpack.c.h.b16 %v385
        %v507 = vunpack.c.l.b16 %v386
        %v508 = vunpack.c.h.b16 %v386
        %v509 = vunpack.c.l.b16 %v387
        %v510 = vunpack.c.h.b16 %v387
        %v511 = vunpack.c.l.b16 %v388
        %v512 = vunpack.c.h.b16 %v388
        %v513 = vunpack.c.l.b16 %v389
        %v514 = vunpack.c.h.b16 %v389
        %v515 = vunpack.c.l.b16 %v390
        %v516 = vunpack.c.h.b16 %v390
        %v517 = vunpack.c.l.b16 %v391
        %v518 = vunpack.c.h.b16 %v391
        %v519 = vunpack.c.l.b16 %v392
        %v520 = vunpack.c.h.b16 %v392
        %v521 = vpack.c.b16 %v459, %v457
        %v522 = vpack.c.b16 %v460, %v458
        %v523 = vpack.c.b16 %v463, %v461
        %v524 = vpack.c.b16 %v464, %v462
        %v525 = vpack.c.b16 %v467, %v465
        %v526 = vpack.c.b16 %v468, %v466
        %v527 = vpack.c.b16 %v471, %v469
        %v528 = vpack.c.b16 %v472, %v470
        %v529 = vpack.c.b16 %v475, %v473
        %v530 = vpack.c.b16 %v476, %v474
        %v531 = vpack.c.b16 %v479, %v477
        %v532 = vpack.c.b16 %v480, %v478
        %v533 = vpack.c.b16 %v483, %v481
        %v534 = vpack.c.b16 %v484, %v482
        %v535 = vpack.c.b16 %v487, %v485
        %v536 = vpack.c.b16 %v488, %v486
        %v537 = vpack.c.b16 %v491, %v489
        %v538 = vpack.c.b16 %v492, %v490
        %v539 = vpack.c.b16 %v495, %v493
        %v540 = vpack.c.b16 %v496, %v494
        %v541 = vpack.c.b16 %v499, %v497
        %v542 = vpack.c.b16 %v500, %v498
        %v543 = vpack.c.b16 %v503, %v501
        %v544 = vpack.c.b16 %v504, %v502
        %v545 = vpack.c.b16 %v507, %v505
        %v546 = vpack.c.b16 %v508, %v506
        %v547 = vpack.c.b16 %v511, %v509
        %v548 = vpack.c.b16 %v512, %v510
        %v549 = vpack.c.b16 %v515, %v513
        %v550 = vpack.c.b16 %v516, %v514
        %v551 = vpack.c.b16 %v519, %v517
        %v552 = vpack.c.b16 %v520, %v518
        %v617 = vunpack.c.l.b16 %v393
        %v618 = vunpack.c.l.b16 %v394
        %v619 = vunpack.c.l.b16 %v395
        %v620 = vunpack.c.l.b16 %v396
        %v621 = vunpack.c.l.b16 %v397
        %v622 = vunpack.c.l.b16 %v398
        %v623 = vunpack.c.l.b16 %v399
        %v624 = vunpack.c.l.b16 %v400
        %v625 = vunpack.c.l.b16 %v401
        %v626 = vunpack.c.l.b16 %v402
        %v627 = vunpack.c.l.b16 %v403
        %v628 = vunpack.c.l.b16 %v404
        %v629 = vunpack.c.l.b16 %v405
        %v630 = vunpack.c.l.b16 %v406
        %v631 = vunpack.c.l.b16 %v407
        %v632 = vunpack.c.l.b16 %v408
        %v633 = vunpack.c.l.b16 %v409
        %v634 = vunpack.c.l.b16 %v410
        %v635 = vunpack.c.l.b16 %v411
        %v636 = vunpack.c.l.b16 %v412
        %v637 = vunpack.c.l.b16 %v413
        %v638 = vunpack.c.l.b16 %v414
        %v639 = vunpack.c.l.b16 %v415
        %v640 = vunpack.c.l.b16 %v416
        %v641 = vunpack.c.l.b16 %v417
        %v642 = vunpack.c.l.b16 %v418
        %v643 = vunpack.c.l.b16 %v419
        %v644 = vunpack.c.l.b16 %v420
        %v645 = vunpack.c.l.b16 %v421
        %v646 = vunpack.c.l.b16 %v422
        %v647 = vunpack.c.l.b16 %v423
        %v648 = vunpack.c.l.b16 %v424
        %v649 = vpack.c.b16 %v618, %v617
        %v650 = vpack.c.b16 %v620, %v619
        %v651 = vpack.c.b16 %v622, %v621
        %v652 = vpack.c.b16 %v624, %v623
        %v653 = vpack.c.b16 %v626, %v625
        %v654 = vpack.c.b16 %v628, %v627
        %v655 = vpack.c.b16 %v630, %v629
        %v656 = vpack.c.b16 %v632, %v631
        %v657 = vpack.c.b16 %v634, %v633
        %v658 = vpack.c.b16 %v636, %v635
        %v659 = vpack.c.b16 %v638, %v637
        %v660 = vpack.c.b16 %v640, %v639
        %v661 = vpack.c.b16 %v642, %v641
        %v662 = vpack.c.b16 %v644, %v643
        %v663 = vpack.c.b16 %v646, %v645
        %v664 = vpack.c.b16 %v648, %v647
        %681 = vmatprep.subr.bf16.mxu0 0
        %682 = vmatpush1.bf16.msra.mxu0 %v649
        %683 = vmatprep.subr.bf16.mxu0 0
        %684 = vmatpush1.bf16.msra.mxu0 %v650
        %685 = vmatprep.subr.bf16.mxu0 0
        %686 = vmatpush1.bf16.msra.mxu0 %v651
        %687 = vmatprep.subr.bf16.mxu0 0
        %688 = vmatpush1.bf16.msra.mxu0 %v652
        %689 = vmatprep.subr.bf16.mxu0 0
        %690 = vmatpush1.bf16.msra.mxu0 %v653
        %691 = vmatprep.subr.bf16.mxu0 0
        %692 = vmatpush1.bf16.msra.mxu0 %v654
        %693 = vmatprep.subr.bf16.mxu0 0
        %694 = vmatpush1.bf16.msra.mxu0 %v655
        %695 = vmatprep.subr.bf16.mxu0 0
        %696 = vmatpush1.bf16.msra.mxu0 %v656
        %697 = vmatprep.subr.bf16.mxu0 0
        %698 = vmatpush1.bf16.msra.mxu0 %v657
        %699 = vmatprep.subr.bf16.mxu0 0
        %700 = vmatpush1.bf16.msra.mxu0 %v658
        %701 = vmatprep.subr.bf16.mxu0 0
        %702 = vmatpush1.bf16.msra.mxu0 %v659
        %703 = vmatprep.subr.bf16.mxu0 0
        %704 = vmatpush1.bf16.msra.mxu0 %v660
        %705 = vmatprep.subr.bf16.mxu0 0
        %706 = vmatpush1.bf16.msra.mxu0 %v661
        %707 = vmatprep.subr.bf16.mxu0 0
        %708 = vmatpush1.bf16.msra.mxu0 %v662
        %709 = vmatprep.subr.bf16.mxu0 0
        %710 = vmatpush1.bf16.msra.mxu0 %v663
        %711 = vmatprep.subr.bf16.mxu0 0
        %712 = vmatpush1.bf16.msra.mxu0 %v664
        %713 = vmatprep.mubr.bf16.mxu0 %v522
        %714 = vmatmul.mubr.bf16.gmra.mrb[0].mxu0 %v521
        %v715 = vpop.f32.mrb[0].mxu0
        %v716 = vadd.f32 0.0, %v715
        %v717 = vpop.f32.mrb[0].mxu0
        %v718 = vpop.f32.mrb[0].mxu0
        %v719 = vadd.f32 0.0, %v718
        %v720 = vpop.f32.mrb[0].mxu0
        %721 = vmatprep.mubr.bf16.mxu0 %v524
        %722 = vmatmul.mubr.bf16.gmra.mrb[0].mxu0 %v523
        %v723 = vpop.f32.mrb[0].mxu0
        %v724 = vadd.f32 0.0, %v723
        %v725 = vpop.f32.mrb[0].mxu0
        %v726 = vpop.f32.mrb[0].mxu0
        %v727 = vadd.f32 0.0, %v726
        %v728 = vpop.f32.mrb[0].mxu0
        %729 = vmatprep.mubr.bf16.mxu0 %v526
        %730 = vmatmul.mubr.bf16.gmra.mrb[0].mxu0 %v525
        %v731 = vpop.f32.mrb[0].mxu0
        %v732 = vadd.f32 0.0, %v731
        %v733 = vpop.f32.mrb[0].mxu0
        %v734 = vpop.f32.mrb[0].mxu0
        %v735 = vadd.f32 0.0, %v734
        %v736 = vpop.f32.mrb[0].mxu0
        %737 = vmatprep.mubr.bf16.mxu0 %v528
        %738 = vmatmul.mubr.bf16.gmra.mrb[0].mxu0 %v527
        %v739 = vpop.f32.mrb[0].mxu0
        %v740 = vadd.f32 0.0, %v739
        %v741 = vpop.f32.mrb[0].mxu0
        %v742 = vpop.f32.mrb[0].mxu0
        %v743 = vadd.f32 0.0, %v742
        %v744 = vpop.f32.mrb[0].mxu0
        %745 = vmatprep.mubr.bf16.mxu0 %v530
        %746 = vmatmul.mubr.bf16.gmra.mrb[0].mxu0 %v529
        %v747 = vpop.f32.mrb[0].mxu0
        %v748 = vadd.f32 0.0, %v747
        %v749 = vpop.f32.mrb[0].mxu0
        %v750 = vpop.f32.mrb[0].mxu0
        %v751 = vadd.f32 0.0, %v750
        %v752 = vpop.f32.mrb[0].mxu0
        %753 = vmatprep.mubr.bf16.mxu0 %v532
        %754 = vmatmul.mubr.bf16.gmra.mrb[0].mxu0 %v531
        %v755 = vpop.f32.mrb[0].mxu0
        %v756 = vadd.f32 0.0, %v755
        %v757 = vpop.f32.mrb[0].mxu0
        %v758 = vpop.f32.mrb[0].mxu0
        %v759 = vadd.f32 0.0, %v758
        %v760 = vpop.f32.mrb[0].mxu0
        %761 = vmatprep.mubr.bf16.mxu0 %v534
        %762 = vmatmul.mubr.bf16.gmra.mrb[0].mxu0 %v533
        %v763 = vpop.f32.mrb[0].mxu0
        %v764 = vadd.f32 0.0, %v763
        %v765 = vpop.f32.mrb[0].mxu0
        %v766 = vpop.f32.mrb[0].mxu0
        %v767 = vadd.f32 0.0, %v766
        %v768 = vpop.f32.mrb[0].mxu0
        %769 = vmatprep.mubr.bf16.mxu0 %v536
        %770 = vmatmul.mubr.bf16.gmra.mrb[0].mxu0 %v535
        %v771 = vpop.f32.mrb[0].mxu0
        %v772 = vadd.f32 0.0, %v771
        %v773 = vpop.f32.mrb[0].mxu0
        %v774 = vpop.f32.mrb[0].mxu0
        %v775 = vadd.f32 0.0, %v774
        %v776 = vpop.f32.mrb[0].mxu0
        %777 = vmatprep.mubr.bf16.mxu0 %v538
        %778 = vmatmul.mubr.bf16.gmra.mrb[0].mxu0 %v537
        %v779 = vpop.f32.mrb[0].mxu0
        %v780 = vadd.f32 0.0, %v779
        %v781 = vpop.f32.mrb[0].mxu0
        %v782 = vpop.f32.mrb[0].mxu0
        %v783 = vadd.f32 0.0, %v782
        %v784 = vpop.f32.mrb[0].mxu0
        %785 = vmatprep.mubr.bf16.mxu0 %v540
        %786 = vmatmul.mubr.bf16.gmra.mrb[0].mxu0 %v539
        %v787 = vpop.f32.mrb[0].mxu0
        %v788 = vadd.f32 0.0, %v787
        %v789 = vpop.f32.mrb[0].mxu0
        %v790 = vpop.f32.mrb[0].mxu0
        %v791 = vadd.f32 0.0, %v790
        %v792 = vpop.f32.mrb[0].mxu0
        %793 = vmatprep.mubr.bf16.mxu0 %v542
        %794 = vmatmul.mubr.bf16.gmra.mrb[0].mxu0 %v541
        %v795 = vpop.f32.mrb[0].mxu0
        %v796 = vadd.f32 0.0, %v795
        %v797 = vpop.f32.mrb[0].mxu0
        %v798 = vpop.f32.mrb[0].mxu0
        %v799 = vadd.f32 0.0, %v798
        %v800 = vpop.f32.mrb[0].mxu0
        %801 = vmatprep.mubr.bf16.mxu0 %v544
        %802 = vmatmul.mubr.bf16.gmra.mrb[0].mxu0 %v543
        %v803 = vpop.f32.mrb[0].mxu0
        %v804 = vadd.f32 0.0, %v803
        %v805 = vpop.f32.mrb[0].mxu0
        %v806 = vpop.f32.mrb[0].mxu0
        %v807 = vadd.f32 0.0, %v806
        %v808 = vpop.f32.mrb[0].mxu0
        %809 = vmatprep.mubr.bf16.mxu0 %v546
        %810 = vmatmul.mubr.bf16.gmra.mrb[0].mxu0 %v545
        %v811 = vpop.f32.mrb[0].mxu0
        %v812 = vadd.f32 0.0, %v811
        %v813 = vpop.f32.mrb[0].mxu0
        %v814 = vpop.f32.mrb[0].mxu0
        %v815 = vadd.f32 0.0, %v814
        %v816 = vpop.f32.mrb[0].mxu0
        %817 = vmatprep.mubr.bf16.mxu0 %v548
        %818 = vmatmul.mubr.bf16.gmra.mrb[0].mxu0 %v547
        %v819 = vpop.f32.mrb[0].mxu0
        %v820 = vadd.f32 0.0, %v819
        %v821 = vpop.f32.mrb[0].mxu0
        %v822 = vpop.f32.mrb[0].mxu0
        %v823 = vadd.f32 0.0, %v822
        %v824 = vpop.f32.mrb[0].mxu0
        %825 = vmatprep.mubr.bf16.mxu0 %v550
        %826 = vmatmul.mubr.bf16.gmra.mrb[0].mxu0 %v549
        %v827 = vpop.f32.mrb[0].mxu0
        %v828 = vadd.f32 0.0, %v827
        %v829 = vpop.f32.mrb[0].mxu0
        %v830 = vpop.f32.mrb[0].mxu0
        %v831 = vadd.f32 0.0, %v830
        %v832 = vpop.f32.mrb[0].mxu0
        %833 = vmatprep.mubr.bf16.mxu0 %v552
        %834 = vmatmul.mubr.bf16.gmra.mrb[0].mxu0 %v551
        %v835 = vpop.f32.mrb[0].mxu0
        %v836 = vadd.f32 0.0, %v835
        %v837 = vpop.f32.mrb[0].mxu0
        %v838 = vpop.f32.mrb[0].mxu0
        %v839 = vadd.f32 0.0, %v838
        %v840 = vpop.f32.mrb[0].mxu0
        %841 = vdwg.mxu0
        %v842 = vadd.f32 %v329, %v716
        %v843 = vadd.f32 %v330, %v719
        %v844 = vadd.f32 %v331, %v724
        %v845 = vadd.f32 %v332, %v727
        %v846 = vadd.f32 %v333, %v732
        %v847 = vadd.f32 %v334, %v735
        %v848 = vadd.f32 %v335, %v740
        %v849 = vadd.f32 %v336, %v743
        %v850 = vadd.f32 %v337, %v748
        %v851 = vadd.f32 %v338, %v751
        %v852 = vadd.f32 %v339, %v756
        %v853 = vadd.f32 %v340, %v759
        %v854 = vadd.f32 %v341, %v764
        %v855 = vadd.f32 %v342, %v767
        %v856 = vadd.f32 %v343, %v772
        %v857 = vadd.f32 %v344, %v775
        %v858 = vadd.f32 %v345, %v780
        %v859 = vadd.f32 %v346, %v783
        %v860 = vadd.f32 %v347, %v788
        %v861 = vadd.f32 %v348, %v791
        %v862 = vadd.f32 %v349, %v796
        %v863 = vadd.f32 %v350, %v799
        %v864 = vadd.f32 %v351, %v804
        %v865 = vadd.f32 %v352, %v807
        %v866 = vadd.f32 %v353, %v812
        %v867 = vadd.f32 %v354, %v815
        %v868 = vadd.f32 %v355, %v820
        %v869 = vadd.f32 %v356, %v823
        %v870 = vadd.f32 %v357, %v828
        %v871 = vadd.f32 %v358, %v831
        %v872 = vadd.f32 %v359, %v836
        %v873 = vadd.f32 %v360, %v839
        %874 = vst [vmem:[#allocation2] sm:$0xff] %v842
        %875 = vst [vmem:[#allocation2 + $0x8] sm:$0xff] %v843
        %876 = vst [vmem:[#allocation2 + $0x10] sm:$0xff] %v844
        %877 = vst [vmem:[#allocation2 + $0x18] sm:$0xff] %v845
        %878 = vst [vmem:[#allocation2 + $0x20] sm:$0xff] %v846
        %879 = vst [vmem:[#allocation2 + $0x28] sm:$0xff] %v847
        %880 = vst [vmem:[#allocation2 + $0x30] sm:$0xff] %v848
        %881 = vst [vmem:[#allocation2 + $0x38] sm:$0xff] %v849
        %882 = vst [vmem:[#allocation2 + $0x40] sm:$0xff] %v850
        %883 = vst [vmem:[#allocation2 + $0x48] sm:$0xff] %v851
        %884 = vst [vmem:[#allocation2 + $0x50] sm:$0xff] %v852
        %885 = vst [vmem:[#allocation2 + $0x58] sm:$0xff] %v853
        %886 = vst [vmem:[#allocation2 + $0x60] sm:$0xff] %v854
        %887 = vst [vmem:[#allocation2 + $0x68] sm:$0xff] %v855
        %888 = vst [vmem:[#allocation2 + $0x70] sm:$0xff] %v856
        %889 = vst [vmem:[#allocation2 + $0x78] sm:$0xff] %v857
        %890 = vst [vmem:[#allocation2 + $0x80] sm:$0xff] %v858
        %891 = vst [vmem:[#allocation2 + $0x88] sm:$0xff] %v859
        %892 = vst [vmem:[#allocation2 + $0x90] sm:$0xff] %v860
        %893 = vst [vmem:[#allocation2 + $0x98] sm:$0xff] %v861
        %894 = vst [vmem:[#allocation2 + $0xa0] sm:$0xff] %v862
        %895 = vst [vmem:[#allocation2 + $0xa8] sm:$0xff] %v863
        %896 = vst [vmem:[#allocation2 + $0xb0] sm:$0xff] %v864
        %897 = vst [vmem:[#allocation2 + $0xb8] sm:$0xff] %v865
        %898 = vst [vmem:[#allocation2 + $0xc0] sm:$0xff] %v866
        %899 = vst [vmem:[#allocation2 + $0xc8] sm:$0xff] %v867
        %900 = vst [vmem:[#allocation2 + $0xd0] sm:$0xff] %v868
        %901 = vst [vmem:[#allocation2 + $0xd8] sm:$0xff] %v869
        %902 = vst [vmem:[#allocation2 + $0xe0] sm:$0xff] %v870
        %903 = vst [vmem:[#allocation2 + $0xe8] sm:$0xff] %v871
        %904 = vst [vmem:[#allocation2 + $0xf0] sm:$0xff] %v872
        %905 = vst [vmem:[#allocation2 + $0xf8] sm:$0xff] %v873
        // Predicated region
        $region41: #{tpu_custom_call.1} parent=27 // pred_check
          %p906 = pneg %p293
        $region42: #{tpu_custom_call.1} parent=27 // pred_check_branch
          %908 = sbr.rel (%p906) target = $region44
        $region43: #{tpu_custom_call.1} parent=27 // pred_region
          %v909 = vld [vmem:[#allocation2] sm:$0xff]
          %v910 = vld [vmem:[#allocation2 + $0x8] sm:$0xff]
          %v911 = vld [vmem:[#allocation2 + $0x10] sm:$0xff]
          %v912 = vld [vmem:[#allocation2 + $0x18] sm:$0xff]
          %v913 = vld [vmem:[#allocation2 + $0x20] sm:$0xff]
          %v914 = vld [vmem:[#allocation2 + $0x28] sm:$0xff]
          %v915 = vld [vmem:[#allocation2 + $0x30] sm:$0xff]
          %v916 = vld [vmem:[#allocation2 + $0x38] sm:$0xff]
          %v917 = vld [vmem:[#allocation2 + $0x40] sm:$0xff]
          %v918 = vld [vmem:[#allocation2 + $0x48] sm:$0xff]
          %v919 = vld [vmem:[#allocation2 + $0x50] sm:$0xff]
          %v920 = vld [vmem:[#allocation2 + $0x58] sm:$0xff]
          %v921 = vld [vmem:[#allocation2 + $0x60] sm:$0xff]
          %v922 = vld [vmem:[#allocation2 + $0x68] sm:$0xff]
          %v923 = vld [vmem:[#allocation2 + $0x70] sm:$0xff]
          %v924 = vld [vmem:[#allocation2 + $0x78] sm:$0xff]
          %v925 = vld [vmem:[#allocation2 + $0x80] sm:$0xff]
          %v926 = vld [vmem:[#allocation2 + $0x88] sm:$0xff]
          %v927 = vld [vmem:[#allocation2 + $0x90] sm:$0xff]
          %v928 = vld [vmem:[#allocation2 + $0x98] sm:$0xff]
          %v929 = vld [vmem:[#allocation2 + $0xa0] sm:$0xff]
          %v930 = vld [vmem:[#allocation2 + $0xa8] sm:$0xff]
          %v931 = vld [vmem:[#allocation2 + $0xb0] sm:$0xff]
          %v932 = vld [vmem:[#allocation2 + $0xb8] sm:$0xff]
          %v933 = vld [vmem:[#allocation2 + $0xc0] sm:$0xff]
          %v934 = vld [vmem:[#allocation2 + $0xc8] sm:$0xff]
          %v935 = vld [vmem:[#allocation2 + $0xd0] sm:$0xff]
          %v936 = vld [vmem:[#allocation2 + $0xd8] sm:$0xff]
          %v937 = vld [vmem:[#allocation2 + $0xe0] sm:$0xff]
          %v938 = vld [vmem:[#allocation2 + $0xe8] sm:$0xff]
          %v939 = vld [vmem:[#allocation2 + $0xf0] sm:$0xff]
          %v940 = vld [vmem:[#allocation2 + $0xf8] sm:$0xff]
          %941 = vst [vmem:[%s275] sm:$0xff] %v909
          %942 = vst [vmem:[%s275 + $0x8] sm:$0xff] %v910
          %943 = vst [vmem:[%s275 + $0x10] sm:$0xff] %v911
          %944 = vst [vmem:[%s275 + $0x18] sm:$0xff] %v912
          %945 = vst [vmem:[%s275 + $0x20] sm:$0xff] %v913
          %946 = vst [vmem:[%s275 + $0x28] sm:$0xff] %v914
          %947 = vst [vmem:[%s275 + $0x30] sm:$0xff] %v915
          %948 = vst [vmem:[%s275 + $0x38] sm:$0xff] %v916
          %949 = vst [vmem:[%s275 + $0x40] sm:$0xff] %v917
          %950 = vst [vmem:[%s275 + $0x48] sm:$0xff] %v918
          %951 = vst [vmem:[%s275 + $0x50] sm:$0xff] %v919
          %952 = vst [vmem:[%s275 + $0x58] sm:$0xff] %v920
          %953 = vst [vmem:[%s275 + $0x60] sm:$0xff] %v921
          %954 = vst [vmem:[%s275 + $0x68] sm:$0xff] %v922
          %955 = vst [vmem:[%s275 + $0x70] sm:$0xff] %v923
          %956 = vst [vmem:[%s275 + $0x78] sm:$0xff] %v924
          %957 = vst [vmem:[%s275 + $0x80] sm:$0xff] %v925
          %958 = vst [vmem:[%s275 + $0x88] sm:$0xff] %v926
          %959 = vst [vmem:[%s275 + $0x90] sm:$0xff] %v927
          %960 = vst [vmem:[%s275 + $0x98] sm:$0xff] %v928
          %961 = vst [vmem:[%s275 + $0xa0] sm:$0xff] %v929
          %962 = vst [vmem:[%s275 + $0xa8] sm:$0xff] %v930
          %963 = vst [vmem:[%s275 + $0xb0] sm:$0xff] %v931
          %964 = vst [vmem:[%s275 + $0xb8] sm:$0xff] %v932
          %965 = vst [vmem:[%s275 + $0xc0] sm:$0xff] %v933
          %966 = vst [vmem:[%s275 + $0xc8] sm:$0xff] %v934
          %967 = vst [vmem:[%s275 + $0xd0] sm:$0xff] %v935
          %968 = vst [vmem:[%s275 + $0xd8] sm:$0xff] %v936
          %969 = vst [vmem:[%s275 + $0xe0] sm:$0xff] %v937
          %970 = vst [vmem:[%s275 + $0xe8] sm:$0xff] %v938
          %971 = vst [vmem:[%s275 + $0xf0] sm:$0xff] %v939
          %972 = vst [vmem:[%s275 + $0xf8] sm:$0xff] %v940
          %v973 = vadd.f32 %v909, %v910
          %v974 = vadd.f32 %v973, %v911
          %v975 = vadd.f32 %v974, %v912
          %v976 = vadd.f32 %v975, %v913
          %v977 = vadd.f32 %v976, %v914
          %v978 = vadd.f32 %v977, %v915
          %v979 = vadd.f32 %v978, %v916
          %v980 = vadd.f32 %v979, %v917
          %v981 = vadd.f32 %v980, %v918
          %v982 = vadd.f32 %v981, %v919
          %v983 = vadd.f32 %v982, %v920
          %v984 = vadd.f32 %v983, %v921
          %v985 = vadd.f32 %v984, %v922
          %v986 = vadd.f32 %v985, %v923
          %v987 = vadd.f32 %v986, %v924
          %v988 = vadd.f32 %v987, %v925
          %v989 = vadd.f32 %v988, %v926
          %v990 = vadd.f32 %v989, %v927
          %v991 = vadd.f32 %v990, %v928
          %v992 = vadd.f32 %v991, %v929
          %v993 = vadd.f32 %v992, %v930
          %v994 = vadd.f32 %v993, %v931
          %v995 = vadd.f32 %v994, %v932
          %v996 = vadd.f32 %v995, %v933
          %v997 = vadd.f32 %v996, %v934
          %v998 = vadd.f32 %v997, %v935
          %v999 = vadd.f32 %v998, %v936
          %v1000 = vadd.f32 %v999, %v937
          %v1001 = vadd.f32 %v1000, %v938
          %v1002 = vadd.f32 %v1001, %v939
          %v1003 = vadd.f32 %v1002, %v940
          %v1004 = vrot.slane %v1003, 4
          %v1005 = vadd.f32 %v1003, %v1004
          %v1006 = vrot.slane %v1005, 2
          %v1007 = vadd.f32 %v1005, %v1006
          %v1008 = vrot.slane %v1007, 1
          %v1009 = vadd.f32 %v1007, %v1008
          %1010 = vst [vmem:[%s281] sm:$0x1] %v1009
          %v1011 = vmul.f32 %v909, %v909
          %v1012 = vmul.f32 %v910, %v910
          %v1013 = vmul.f32 %v911, %v911
          %v1014 = vmul.f32 %v912, %v912
          %v1015 = vmul.f32 %v913, %v913
          %v1016 = vmul.f32 %v914, %v914
          %v1017 = vmul.f32 %v915, %v915
          %v1018 = vmul.f32 %v916, %v916
          %v1019 = vmul.f32 %v917, %v917
          %v1020 = vmul.f32 %v918, %v918
          %v1021 = vmul.f32 %v919, %v919
          %v1022 = vmul.f32 %v920, %v920
          %v1023 = vmul.f32 %v921, %v921
          %v1024 = vmul.f32 %v922, %v922
          %v1025 = vmul.f32 %v923, %v923
          %v1026 = vmul.f32 %v924, %v924
          %v1027 = vmul.f32 %v925, %v925
          %v1028 = vmul.f32 %v926, %v926
          %v1029 = vmul.f32 %v927, %v927
          %v1030 = vmul.f32 %v928, %v928
          %v1031 = vmul.f32 %v929, %v929
          %v1032 = vmul.f32 %v930, %v930
          %v1033 = vmul.f32 %v931, %v931
          %v1034 = vmul.f32 %v932, %v932
          %v1035 = vmul.f32 %v933, %v933
          %v1036 = vmul.f32 %v934, %v934
          %v1037 = vmul.f32 %v935, %v935
          %v1038 = vmul.f32 %v936, %v936
          %v1039 = vmul.f32 %v937, %v937
          %v1040 = vmul.f32 %v938, %v938
          %v1041 = vmul.f32 %v939, %v939
          %v1042 = vmul.f32 %v940, %v940
          %v1043 = vadd.f32 %v1011, %v1012
          %v1044 = vadd.f32 %v1043, %v1013
          %v1045 = vadd.f32 %v1044, %v1014
          %v1046 = vadd.f32 %v1045, %v1015
          %v1047 = vadd.f32 %v1046, %v1016
          %v1048 = vadd.f32 %v1047, %v1017
          %v1049 = vadd.f32 %v1048, %v1018
          %v1050 = vadd.f32 %v1049, %v1019
          %v1051 = vadd.f32 %v1050, %v1020
          %v1052 = vadd.f32 %v1051, %v1021
          %v1053 = vadd.f32 %v1052, %v1022
          %v1054 = vadd.f32 %v1053, %v1023
          %v1055 = vadd.f32 %v1054, %v1024
          %v1056 = vadd.f32 %v1055, %v1025
          %v1057 = vadd.f32 %v1056, %v1026
          %v1058 = vadd.f32 %v1057, %v1027
          %v1059 = vadd.f32 %v1058, %v1028
          %v1060 = vadd.f32 %v1059, %v1029
          %v1061 = vadd.f32 %v1060, %v1030
          %v1062 = vadd.f32 %v1061, %v1031
          %v1063 = vadd.f32 %v1062, %v1032
          %v1064 = vadd.f32 %v1063, %v1033
          %v1065 = vadd.f32 %v1064, %v1034
          %v1066 = vadd.f32 %v1065, %v1035
          %v1067 = vadd.f32 %v1066, %v1036
          %v1068 = vadd.f32 %v1067, %v1037
          %v1069 = vadd.f32 %v1068, %v1038
          %v1070 = vadd.f32 %v1069, %v1039
          %v1071 = vadd.f32 %v1070, %v1040
          %v1072 = vadd.f32 %v1071, %v1041
          %v1073 = vadd.f32 %v1072, %v1042
          %v1074 = vrot.slane %v1073, 4
          %v1075 = vadd.f32 %v1073, %v1074
          %v1076 = vrot.slane %v1075, 2
          %v1077 = vadd.f32 %v1075, %v1076
          %v1078 = vrot.slane %v1077, 1
          %v1079 = vadd.f32 %v1077, %v1078
          %1080 = vst [vmem:[%s287] sm:$0x1] %v1079
        $region44: #{tpu_custom_call.1} parent=27 // pred_fallthru
          _
        %s1081 = sand.u32 %s111, 1
        %s1082 = scalar_lea.sflag [#allocation5], %s1081
        %s1083 = sand.u32 %s111, 1
        %s1084 = smul.addr %s1083, 256
        %s1085 = scalar_lea.vmem [#allocation8], %s1084
        %s1086 = sand.u32 %s26, 1
        %s1087 = scalar_lea.sflag [#allocation10], %s1086
        %s1088 = sand.u32 %s139, 1
        %s1089 = scalar_lea.vmem [#allocation9], %s1088
        %s1090 = sand.u32 %s26, 1
        %s1091 = scalar_lea.sflag [#allocation10], %s1090
        %s1092 = sand.u32 %s167, 1
        %s1093 = scalar_lea.vmem [#allocation11], %s1092
        // Predicated region
        $region45: #{tpu_custom_call.1} parent=27 // pred_check
          %p1094 = pneg %p121
        $region46: #{tpu_custom_call.1} parent=27 // pred_check_branch
          %1096 = sbr.rel (%p1094) target = $region48
        $region47: #{tpu_custom_call.1} parent=27 // pred_region
          %s1097 = smul.u32 32, %s31
          %s1099 = ssub.s32 4096, 4096
          %1100 = vsyncadd %s1082, %s1099
          %s1101 = sadd.s32 %s32, %s1097
          %s1102 = smul.addr %s1101, 128
          %s1103 = scalar_lea.hbm %s2, %s1102
          %s1104 = sshll.u32 %s1085, 4
          %s1105 = int_to_ptr.vmem [resolvable:$true] %s1104
          %1110 = dma.vmem_to_hbm [thread:$0]  %s1105, 4096, %s1103, %s1082, 128, 128, 8
        $region48: #{tpu_custom_call.1} parent=27 // pred_fallthru
          _
        // Predicated region
        $region49: #{tpu_custom_call.1} parent=27 // pred_check
          %p1111 = pneg %p149
        $region50: #{tpu_custom_call.1} parent=27 // pred_check_branch
          %1113 = sbr.rel (%p1111) target = $region52
        $region51: #{tpu_custom_call.1} parent=27 // pred_region
          %s1115 = ssub.s32 16, 16
          %1116 = vsyncadd %s1087, %s1115
          %s1117 = sadd.s32 %s32, %s31
          %s1118 = smul.addr %s1117, 16
          %s1119 = scalar_lea.hbm %s3, %s1118
          %s1121 = sshll.u32 %s1089, 4
          %s1122 = int_to_ptr.vmem [resolvable:$true] %s1121
          %1124 = dma.vmem_to_hbm [thread:$0]  %s1122, 16, %s1119, %s1087
        $region52: #{tpu_custom_call.1} parent=27 // pred_fallthru
          _
        // Predicated region
        $region53: #{tpu_custom_call.1} parent=27 // pred_check
          %p1125 = pneg %p177
        $region54: #{tpu_custom_call.1} parent=27 // pred_check_branch
          %1127 = sbr.rel (%p1125) target = $region56
        $region55: #{tpu_custom_call.1} parent=27 // pred_region
          %s1129 = ssub.s32 16, 16
          %1130 = vsyncadd %s1091, %s1129
          %s1131 = sadd.s32 %s32, %s31
          %s1132 = smul.addr %s1131, 16
          %s1133 = scalar_lea.hbm %s4, %s1132
          %s1135 = sshll.u32 %s1093, 4
          %s1136 = int_to_ptr.vmem [resolvable:$true] %s1135
          %1138 = dma.vmem_to_hbm [thread:$0]  %s1136, 16, %s1133, %s1091
        $region56: #{tpu_custom_call.1} parent=27 // pred_fallthru
          _
      $region28: #{tpu_custom_call.1} parent=5 // pred_fallthru
        _
      %p1139 = scmp.le.s32.totalorder 2, %s21
      // Predicated region
      $region57: #{tpu_custom_call.1} parent=5 // pred_check
        %p1140 = pneg %p1139
      $region58: #{tpu_custom_call.1} parent=5 // pred_check_branch
        %1142 = sbr.rel (%p1140) target = $region60
      $region59: #{tpu_custom_call.1} parent=5 // pred_region
        %s1143 = ssub.s32 %s21, 2
        // Predicated region
        $region61: #{tpu_custom_call.1} parent=59 // pred_check
          %p1144 = pneg %p127
        $region62: #{tpu_custom_call.1} parent=59 // pred_check_branch
          %1146 = sbr.rel (%p1144) target = $region64
        $region63: #{tpu_custom_call.1} parent=59 // pred_region
          %s1147 = sand.u32 %s112, 1
          %s1148 = scalar_lea.sflag [#allocation5], %s1147
          %s1149 = sand.u32 %s112, 1
          %s1150 = smul.addr %s1149, 256
          %s1151 = scalar_lea.vmem [#allocation8], %s1150
          %1152 = dma.done %s1148, 4096
        $region64: #{tpu_custom_call.1} parent=59 // pred_fallthru
          _
        // Predicated region
        $region65: #{tpu_custom_call.1} parent=59 // pred_check
          %p1153 = pneg %p155
        $region66: #{tpu_custom_call.1} parent=59 // pred_check_branch
          %1155 = sbr.rel (%p1153) target = $region68
        $region67: #{tpu_custom_call.1} parent=59 // pred_region
          %s1156 = sand.u32 %s27, 1
          %s1157 = scalar_lea.sflag [#allocation10], %s1156
          %s1158 = sand.u32 %s140, 1
          %s1159 = scalar_lea.vmem [#allocation9], %s1158
          %1160 = dma.done %s1157, 16
        $region68: #{tpu_custom_call.1} parent=59 // pred_fallthru
          _
        // Predicated region
        $region69: #{tpu_custom_call.1} parent=59 // pred_check
          %p1161 = pneg %p183
        $region70: #{tpu_custom_call.1} parent=59 // pred_check_branch
          %1163 = sbr.rel (%p1161) target = $region72
        $region71: #{tpu_custom_call.1} parent=59 // pred_region
          %s1164 = sand.u32 %s27, 1
          %s1165 = scalar_lea.sflag [#allocation10], %s1164
          %s1166 = sand.u32 %s168, 1
          %s1167 = scalar_lea.vmem [#allocation11], %s1166
          %1168 = dma.done %s1165, 16
        $region72: #{tpu_custom_call.1} parent=59 // pred_fallthru
          _
      $region60: #{tpu_custom_call.1} parent=5 // pred_fallthru
        _
    $region6: #{tpu_custom_call.1} parent=1 // loop_footer
      %s25 = sadd.s32 1, %s21
    $region7: #{tpu_custom_call.1} parent=1 // loop_footer_branch
      %20 = sbr.rel target = $region3
    $region8: #{tpu_custom_call.1} parent=1 // loop_exit
      _
    %1169 = vsyncpa [#allocation4], 1
    %s1170 = scalar_lea.sflag [#allocation4], 1
    %1171 = vsyncpa %s1170, 1
    %1172 = vsyncpa [#allocation7], 1
    %1173 = vsyncpa [#allocation5], 1
    %s1174 = scalar_lea.sflag [#allocation5], 1
    %1175 = vsyncpa %s1174, 1
    %1176 = vsyncpa [#allocation10], 1
    %s1177 = scalar_lea.sflag [#allocation10], 1
    %1178 = vsyncpa %s1177, 1

</llo_original>
